<compile_context>
chip_gen: v7x
topology: tpu7x:2x2x1
jax: 0.10.0
libtpu: 0.0.40
codegen_flags: <defaults>
</compile_context>

<pallas_src>
import functools

import jax
import jax.numpy as jnp
from jax.experimental import pallas as pl
from jax.experimental.pallas import tpu as pltpu


OUT_PAD = 8  # padded output width (true output width is 3)


def _kpi_mlp_kernel(x_ref,
                    w1_ref, b1_ref,
                    w2_ref, b2_ref,
                    w3_ref, b3_ref,
                    w4_ref, b4_ref,
                    o_ref):
    x = x_ref[...]          # (TB, 4)
    w1 = w1_ref[...]        # (4, 128)

    # Layer 1 (K=4): 4 broadcast multiply-adds on the VPU; a K=4 matmul would
    # use ~3% of the MXU's contraction depth.
    h = x[:, 0:1] * w1[0:1, :] + b1_ref[...]
    for k in range(1, 4):
        h = h + x[:, k:k + 1] * w1[k:k + 1, :]
    h = jnp.maximum(h, 0.0)

    # Layers 2-3 on the MXU (well-shaped contractions), f32 accumulation.
    h = jnp.dot(h, w2_ref[...], preferred_element_type=jnp.float32) + b2_ref[...]
    h = jnp.maximum(h, 0.0)

    h = jnp.dot(h, w3_ref[...], preferred_element_type=jnp.float32) + b3_ref[...]
    h = jnp.maximum(h, 0.0)

    # Layer 4: weights zero-padded to OUT_PAD lanes; single (TB, OUT_PAD)
    # store, contiguous HBM writeback.
    out = jnp.dot(h, w4_ref[...], preferred_element_type=jnp.float32) + b4_ref[...]
    o_ref[...] = out.astype(o_ref.dtype)


def _round_up(n, m):
    return ((n + m - 1) // m) * m


def _resident_spec(shape):
    # Whole array as one block, same block for every grid step -> stays in VMEM.
    return pl.BlockSpec(shape, lambda i: tuple(0 for _ in shape))


@functools.partial(jax.jit, static_argnames=("tb",))
def kpi_model_forward(x, params, *, tb=2048):
    """x: (B, 4) float32; params: dict of w1..w4 / b1..b4 with weights stored
    transposed vs. PyTorch, i.e. (in_features, out_features)."""
    B = x.shape[0]
    # Batch tile: multiple of 8, capped at `tb`; pad batch to a multiple of TB.
    TB = min(tb, _round_up(B, 8))
    B_pad = _round_up(B, TB)
    if B_pad != B:
        x = jnp.pad(x, ((0, B_pad - B), (0, 0)))
    num_tiles = B_pad // TB

    # Zero-pad the last layer to OUT_PAD output lanes.
    w4p = jnp.zeros((32, OUT_PAD), jnp.float32).at[:, :3].set(params["w4"])
    b4p = jnp.zeros((1, OUT_PAD), jnp.float32).at[:, :3].set(params["b4"])

    weight_args = (params["w1"], params["b1"],
                   params["w2"], params["b2"],
                   params["w3"], params["b3"],
                   w4p, b4p)

    in_specs = [pl.BlockSpec((TB, 4), lambda i: (i, 0))]
    in_specs += [_resident_spec(w.shape) for w in weight_args]
    out_spec = pl.BlockSpec((TB, OUT_PAD), lambda i: (i, 0))

    flops_per_row = 2 * (4 * 128 + 128 * 64 + 64 * 32 + 32 * OUT_PAD)
    weight_bytes = sum(int(w.size) * 4 for w in weight_args)
    cost = pl.CostEstimate(
        flops=B_pad * flops_per_row,
        transcendentals=0,
        bytes_accessed=B_pad * 4 * 4 + B_pad * OUT_PAD * 4 + weight_bytes,
    )

    out_padded = pl.pallas_call(
        _kpi_mlp_kernel,
        out_shape=jax.ShapeDtypeStruct((B_pad, OUT_PAD), jnp.float32),
        grid_spec=pltpu.PrefetchScalarGridSpec(
            num_scalar_prefetch=0,
            grid=(num_tiles,),
            in_specs=in_specs,
            out_specs=out_spec,
        ),
        compiler_params=pltpu.CompilerParams(
            dimension_semantics=("parallel",),   # megacore sharding on v7x
        ),
        cost_estimate=cost,
    )(x, *weight_args)

    return out_padded[:B, :3]


def init_params(key):
    """Deterministic init matching PyTorch Linear shapes.

    PyTorch stores weight as (out_features, in_features); we store the
    transpose (in_features, out_features) so the kernel does x @ W + b.
    Uses uniform(-1/sqrt(fan_in), 1/sqrt(fan_in)) like torch's default.
    """
    dims = [(4, 128), (128, 64), (64, 32), (32, 3)]
    params = {}
    for i, (fan_in, fan_out) in enumerate(dims, start=1):
        key, kw, kb = jax.random.split(key, 3)
        bound = 1.0 / jnp.sqrt(jnp.float32(fan_in))
        params[f"w{i}"] = jax.random.uniform(
            kw, (fan_in, fan_out), jnp.float32, -bound, bound)
        params[f"b{i}"] = jax.random.uniform(
            kb, (1, fan_out), jnp.float32, -bound, bound)
    return params


def reference_forward(x, params):
    h = x
    for i in range(1, 4):
        h = jnp.maximum(h @ params[f"w{i}"] + params[f"b{i}"], 0.0)
    return h @ params["w4"] + params["b4"]


if __name__ == "__main__":
    key = jax.random.PRNGKey(0)
    key, kx1, kx2 = jax.random.split(key, 3)
    params = init_params(key)

    # Small-batch check (single tile, TB = 8).
    B1 = 8
    x1 = jax.random.normal(kx1, (B1, 4), jnp.float32)
    out1 = jax.block_until_ready(kpi_model_forward(x1, params))
    ref1 = reference_forward(x1, params)
    assert out1.shape == (B1, 3), out1.shape
    assert jnp.allclose(out1, ref1, atol=1e-5, rtol=1e-5), "mismatch (B=8)"

    # Multi-tile check with batch padding (grid of 3 tiles, TB = 128).
    B2 = 300
    x2 = jax.random.normal(kx2, (B2, 4), jnp.float32)
    out2 = jax.block_until_ready(kpi_model_forward(x2, params, tb=128))
    ref2 = reference_forward(x2, params)
    assert out2.shape == (B2, 3), out2.shape
    assert jnp.allclose(out2, ref2, atol=1e-5, rtol=1e-5), "mismatch (B=300)"

    print("KERNEL_OK")
</pallas_src>

<mosaic_0001>
module attributes {stable_mosaic.version = 11 : i64} {
  func.func @_kpi_mlp_kernel(%arg0: i32, %arg1: memref<8x4xf32, #tpu.memory_space<vmem>>, %arg2: memref<4x128xf32, #tpu.memory_space<vmem>>, %arg3: memref<1x128xf32, #tpu.memory_space<vmem>>, %arg4: memref<128x64xf32, #tpu.memory_space<vmem>>, %arg5: memref<1x64xf32, #tpu.memory_space<vmem>>, %arg6: memref<64x32xf32, #tpu.memory_space<vmem>>, %arg7: memref<1x32xf32, #tpu.memory_space<vmem>>, %arg8: memref<32x8xf32, #tpu.memory_space<vmem>>, %arg9: memref<1x8xf32, #tpu.memory_space<vmem>>, %arg10: memref<8x8xf32, #tpu.memory_space<vmem>>) attributes {dimension_semantics = [#tpu.dimension_semantics<parallel>], iteration_bounds = array<i64: 1>, scalar_prefetch = 0 : i64, scratch_operands = 0 : i64, tpu.core_type = #tpu.core_type<tc>, window_params = [{transform_indices = @transform_0, window_bounds = array<i64: 8, 4>}, {pipeline_mode = #tpu.pipeline_mode<synchronous>, transform_indices = @transform_1, window_bounds = array<i64: 4, 128>}, {pipeline_mode = #tpu.pipeline_mode<synchronous>, transform_indices = @transform_2, window_bounds = array<i64: 1, 128>}, {pipeline_mode = #tpu.pipeline_mode<synchronous>, transform_indices = @transform_3, window_bounds = array<i64: 128, 64>}, {pipeline_mode = #tpu.pipeline_mode<synchronous>, transform_indices = @transform_4, window_bounds = array<i64: 1, 64>}, {pipeline_mode = #tpu.pipeline_mode<synchronous>, transform_indices = @transform_5, window_bounds = array<i64: 64, 32>}, {pipeline_mode = #tpu.pipeline_mode<synchronous>, transform_indices = @transform_6, window_bounds = array<i64: 1, 32>}, {pipeline_mode = #tpu.pipeline_mode<synchronous>, transform_indices = @transform_7, window_bounds = array<i64: 32, 8>}, {pipeline_mode = #tpu.pipeline_mode<synchronous>, transform_indices = @transform_8, window_bounds = array<i64: 1, 8>}, {transform_indices = @transform_9, window_bounds = array<i64: 8, 8>}]} {
    %c0 = arith.constant 0 : index
    %c0_0 = arith.constant 0 : index
    %0 = vector.load %arg1[%c0, %c0_0] : memref<8x4xf32, #tpu.memory_space<vmem>>, vector<8x4xf32>
    %c0_1 = arith.constant 0 : index
    %c0_2 = arith.constant 0 : index
    %1 = vector.load %arg2[%c0_1, %c0_2] : memref<4x128xf32, #tpu.memory_space<vmem>>, vector<4x128xf32>
    %2 = vector.extract_strided_slice %0 {offsets = [0, 0], sizes = [8, 1], strides = [1, 1]} : vector<8x4xf32> to vector<8x1xf32>
    %3 = vector.extract_strided_slice %1 {offsets = [0, 0], sizes = [1, 128], strides = [1, 1]} : vector<4x128xf32> to vector<1x128xf32>
    %4 = vector.broadcast %2 : vector<8x1xf32> to vector<8x128xf32>
    %5 = vector.broadcast %3 : vector<1x128xf32> to vector<8x128xf32>
    %6 = arith.mulf %4, %5 : vector<8x128xf32>
    %c0_3 = arith.constant 0 : index
    %c0_4 = arith.constant 0 : index
    %7 = vector.load %arg3[%c0_3, %c0_4] : memref<1x128xf32, #tpu.memory_space<vmem>>, vector<1x128xf32>
    %8 = vector.broadcast %7 : vector<1x128xf32> to vector<8x128xf32>
    %9 = arith.addf %6, %8 : vector<8x128xf32>
    %10 = vector.extract_strided_slice %0 {offsets = [0, 1], sizes = [8, 1], strides = [1, 1]} : vector<8x4xf32> to vector<8x1xf32>
    %11 = vector.extract_strided_slice %1 {offsets = [1, 0], sizes = [1, 128], strides = [1, 1]} : vector<4x128xf32> to vector<1x128xf32>
    %12 = vector.broadcast %10 : vector<8x1xf32> to vector<8x128xf32>
    %13 = vector.broadcast %11 : vector<1x128xf32> to vector<8x128xf32>
    %14 = arith.mulf %12, %13 : vector<8x128xf32>
    %15 = arith.addf %9, %14 : vector<8x128xf32>
    %16 = vector.extract_strided_slice %0 {offsets = [0, 2], sizes = [8, 1], strides = [1, 1]} : vector<8x4xf32> to vector<8x1xf32>
    %17 = vector.extract_strided_slice %1 {offsets = [2, 0], sizes = [1, 128], strides = [1, 1]} : vector<4x128xf32> to vector<1x128xf32>
    %18 = vector.broadcast %16 : vector<8x1xf32> to vector<8x128xf32>
    %19 = vector.broadcast %17 : vector<1x128xf32> to vector<8x128xf32>
    %20 = arith.mulf %18, %19 : vector<8x128xf32>
    %21 = arith.addf %15, %20 : vector<8x128xf32>
    %22 = vector.extract_strided_slice %0 {offsets = [0, 3], sizes = [8, 1], strides = [1, 1]} : vector<8x4xf32> to vector<8x1xf32>
    %23 = vector.extract_strided_slice %1 {offsets = [3, 0], sizes = [1, 128], strides = [1, 1]} : vector<4x128xf32> to vector<1x128xf32>
    %24 = vector.broadcast %22 : vector<8x1xf32> to vector<8x128xf32>
    %25 = vector.broadcast %23 : vector<1x128xf32> to vector<8x128xf32>
    %26 = arith.mulf %24, %25 : vector<8x128xf32>
    %27 = arith.addf %21, %26 : vector<8x128xf32>
    %cst = arith.constant 0.000000e+00 : f32
    %28 = vector.broadcast %cst : f32 to vector<8x128xf32>
    %29 = arith.maximumf %27, %28 : vector<8x128xf32>
    %c0_5 = arith.constant 0 : index
    %c0_6 = arith.constant 0 : index
    %30 = vector.load %arg4[%c0_5, %c0_6] : memref<128x64xf32, #tpu.memory_space<vmem>>, vector<128x64xf32>
    %cst_7 = arith.constant dense<0.000000e+00> : vector<8x64xf32>
    %31 = tpu.matmul %29, %30, %cst_7 {dimension_numbers = #tpu.dot_dimension_numbers<[1], [0], [0], [1], [0, 0, 1, 1], [], []>} : vector<8x128xf32>, vector<128x64xf32>, vector<8x64xf32> -> vector<8x64xf32>
    %c0_8 = arith.constant 0 : index
    %c0_9 = arith.constant 0 : index
    %32 = vector.load %arg5[%c0_8, %c0_9] : memref<1x64xf32, #tpu.memory_space<vmem>>, vector<1x64xf32>
    %33 = vector.broadcast %32 : vector<1x64xf32> to vector<8x64xf32>
    %34 = arith.addf %31, %33 : vector<8x64xf32>
    %cst_10 = arith.constant 0.000000e+00 : f32
    %35 = vector.broadcast %cst_10 : f32 to vector<8x64xf32>
    %36 = arith.maximumf %34, %35 : vector<8x64xf32>
    %c0_11 = arith.constant 0 : index
    %c0_12 = arith.constant 0 : index
    %37 = vector.load %arg6[%c0_11, %c0_12] : memref<64x32xf32, #tpu.memory_space<vmem>>, vector<64x32xf32>
    %cst_13 = arith.constant dense<0.000000e+00> : vector<8x32xf32>
    %38 = tpu.matmul %36, %37, %cst_13 {dimension_numbers = #tpu.dot_dimension_numbers<[1], [0], [0], [1], [0, 0, 1, 1], [], []>} : vector<8x64xf32>, vector<64x32xf32>, vector<8x32xf32> -> vector<8x32xf32>
    %c0_14 = arith.constant 0 : index
    %c0_15 = arith.constant 0 : index
    %39 = vector.load %arg7[%c0_14, %c0_15] : memref<1x32xf32, #tpu.memory_space<vmem>>, vector<1x32xf32>
    %40 = vector.broadcast %39 : vector<1x32xf32> to vector<8x32xf32>
    %41 = arith.addf %38, %40 : vector<8x32xf32>
    %cst_16 = arith.constant 0.000000e+00 : f32
    %42 = vector.broadcast %cst_16 : f32 to vector<8x32xf32>
    %43 = arith.maximumf %41, %42 : vector<8x32xf32>
    %c0_17 = arith.constant 0 : index
    %c0_18 = arith.constant 0 : index
    %44 = vector.load %arg8[%c0_17, %c0_18] : memref<32x8xf32, #tpu.memory_space<vmem>>, vector<32x8xf32>
    %cst_19 = arith.constant dense<0.000000e+00> : vector<8x8xf32>
    %45 = tpu.matmul %43, %44, %cst_19 {dimension_numbers = #tpu.dot_dimension_numbers<[1], [0], [0], [1], [0, 0, 1, 1], [], []>} : vector<8x32xf32>, vector<32x8xf32>, vector<8x8xf32> -> vector<8x8xf32>
    %c0_20 = arith.constant 0 : index
    %c0_21 = arith.constant 0 : index
    %46 = vector.load %arg9[%c0_20, %c0_21] : memref<1x8xf32, #tpu.memory_space<vmem>>, vector<1x8xf32>
    %47 = vector.broadcast %46 : vector<1x8xf32> to vector<8x8xf32>
    %48 = arith.addf %45, %47 : vector<8x8xf32>
    %c0_22 = arith.constant 0 : index
    %c0_23 = arith.constant 0 : index
    %49 = vector.load %arg10[%c0_22, %c0_23] : memref<8x8xf32, #tpu.memory_space<vmem>>, vector<8x8xf32>
    tpu.vector_store %arg10[%c0_22, %c0_23], %48 {strides = array<i32>} : memref<8x8xf32, #tpu.memory_space<vmem>>, vector<8x8xf32>,
    return
  }
  func.func @transform_0(%arg0: i32) -> (i32, i32) {
    %c0_i32 = arith.constant 0 : i32
    %c0_i32_0 = arith.constant 0 : i32
    return %arg0, %c0_i32 : i32, i32
  }
  func.func @transform_1(%arg0: i32) -> (i32, i32) {
    %c0_i32 = arith.constant 0 : i32
    %c0_i32_0 = arith.constant 0 : i32
    %c0_i32_1 = arith.constant 0 : i32
    return %c0_i32, %c0_i32_0 : i32, i32
  }
  func.func @transform_2(%arg0: i32) -> (i32, i32) {
    %c0_i32 = arith.constant 0 : i32
    %c0_i32_0 = arith.constant 0 : i32
    %c0_i32_1 = arith.constant 0 : i32
    return %c0_i32, %c0_i32_0 : i32, i32
  }
  func.func @transform_3(%arg0: i32) -> (i32, i32) {
    %c0_i32 = arith.constant 0 : i32
    %c0_i32_0 = arith.constant 0 : i32
    %c0_i32_1 = arith.constant 0 : i32
    return %c0_i32, %c0_i32_0 : i32, i32
  }
  func.func @transform_4(%arg0: i32) -> (i32, i32) {
    %c0_i32 = arith.constant 0 : i32
    %c0_i32_0 = arith.constant 0 : i32
    %c0_i32_1 = arith.constant 0 : i32
    return %c0_i32, %c0_i32_0 : i32, i32
  }
  func.func @transform_5(%arg0: i32) -> (i32, i32) {
    %c0_i32 = arith.constant 0 : i32
    %c0_i32_0 = arith.constant 0 : i32
    %c0_i32_1 = arith.constant 0 : i32
    return %c0_i32, %c0_i32_0 : i32, i32
  }
  func.func @transform_6(%arg0: i32) -> (i32, i32) {
    %c0_i32 = arith.constant 0 : i32
    %c0_i32_0 = arith.constant 0 : i32
    %c0_i32_1 = arith.constant 0 : i32
    return %c0_i32, %c0_i32_0 : i32, i32
  }
  func.func @transform_7(%arg0: i32) -> (i32, i32) {
    %c0_i32 = arith.constant 0 : i32
    %c0_i32_0 = arith.constant 0 : i32
    %c0_i32_1 = arith.constant 0 : i32
    return %c0_i32, %c0_i32_0 : i32, i32
  }
  func.func @transform_8(%arg0: i32) -> (i32, i32) {
    %c0_i32 = arith.constant 0 : i32
    %c0_i32_0 = arith.constant 0 : i32
    %c0_i32_1 = arith.constant 0 : i32
    return %c0_i32, %c0_i32_0 : i32, i32
  }
  func.func @transform_9(%arg0: i32) -> (i32, i32) {
    %c0_i32 = arith.constant 0 : i32
    %c0_i32_0 = arith.constant 0 : i32
    return %arg0, %c0_i32 : i32, i32
  }
}

</mosaic_0001>

<llo_original>
// kernel: kpi_model_forward.1
$region0: #{kpi_model_forward.1}
  #allocation0 [shape = 'u32[]', space=smem, size = 0x4, offset = 0x4, fixed_abs, tag = 'smem constant byte address 0x4 - core index']
  #allocation1 [shape = 'u32[144,128]{1,0:T(1,128)}', space=vmem, size = 0x12000, scoped, tag = 'internal scratch']
  %s0 = inlined_call_operand.vmem [shape: f32[8,4], index: 0, kind: input, shape index: {}]
  %s1 = inlined_call_operand.vmem [shape: f32[4,128], index: 1, kind: input, shape index: {}]
  %s2 = inlined_call_operand.vmem [shape: f32[1,128], index: 2, kind: input, shape index: {}]
  %s3 = inlined_call_operand.vmem [shape: f32[128,64], index: 3, kind: input, shape index: {}]
  %s4 = inlined_call_operand.vmem [shape: f32[1,64], index: 4, kind: input, shape index: {}]
  %s5 = inlined_call_operand.vmem [shape: f32[64,32], index: 5, kind: input, shape index: {}]
  %s6 = inlined_call_operand.vmem [shape: f32[1,32], index: 6, kind: input, shape index: {}]
  %s7 = inlined_call_operand.vmem [shape: f32[32,8], index: 7, kind: input, shape index: {}]
  %s8 = inlined_call_operand.vmem [shape: f32[1,8], index: 8, kind: input, shape index: {}]
  %s9 = inlined_call_operand.vmem [shape: f32[8,8], index: 9, kind: output, shape index: {}]
  %s10 = sld [smem:[#allocation0]]
  $region46: #{kpi_model_forward.1} parent=0
    _
  %s12 = ssub.s32 1, %s10
  %s13 = scalar_select 0, %s12, %s10
  // Predicated region
  $region2: #{kpi_model_forward.1} parent=0 // pred_check
    _
  $region3: #{kpi_model_forward.1} parent=0 // pred_check_branch
    %15 = sbr.rel (0) target = $region5
  $region4: #{kpi_model_forward.1} parent=0 // pred_region
    _
  $region5: #{kpi_model_forward.1} parent=0 // pred_fallthru
    _
  // Predicated region
  $region6: #{kpi_model_forward.1} parent=0 // pred_check
    _
  $region7: #{kpi_model_forward.1} parent=0 // pred_check_branch
    %17 = sbr.rel (0) target = $region9
  $region8: #{kpi_model_forward.1} parent=0 // pred_region
    _
  $region9: #{kpi_model_forward.1} parent=0 // pred_fallthru
    _
  // Predicated region
  $region10: #{kpi_model_forward.1} parent=0 // pred_check
    _
  $region11: #{kpi_model_forward.1} parent=0 // pred_check_branch
    %19 = sbr.rel (0) target = $region13
  $region12: #{kpi_model_forward.1} parent=0 // pred_region
    _
  $region13: #{kpi_model_forward.1} parent=0 // pred_fallthru
    _
  // Predicated region
  $region14: #{kpi_model_forward.1} parent=0 // pred_check
    _
  $region15: #{kpi_model_forward.1} parent=0 // pred_check_branch
    %21 = sbr.rel (0) target = $region17
  $region16: #{kpi_model_forward.1} parent=0 // pred_region
    _
  $region17: #{kpi_model_forward.1} parent=0 // pred_fallthru
    _
  // Predicated region
  $region18: #{kpi_model_forward.1} parent=0 // pred_check
    _
  $region19: #{kpi_model_forward.1} parent=0 // pred_check_branch
    %23 = sbr.rel (0) target = $region21
  $region20: #{kpi_model_forward.1} parent=0 // pred_region
    _
  $region21: #{kpi_model_forward.1} parent=0 // pred_fallthru
    _
  // Predicated region
  $region22: #{kpi_model_forward.1} parent=0 // pred_check
    _
  $region23: #{kpi_model_forward.1} parent=0 // pred_check_branch
    %25 = sbr.rel (0) target = $region25
  $region24: #{kpi_model_forward.1} parent=0 // pred_region
    _
  $region25: #{kpi_model_forward.1} parent=0 // pred_fallthru
    _
  // Predicated region
  $region26: #{kpi_model_forward.1} parent=0 // pred_check
    _
  $region27: #{kpi_model_forward.1} parent=0 // pred_check_branch
    %27 = sbr.rel (0) target = $region29
  $region28: #{kpi_model_forward.1} parent=0 // pred_region
    _
  $region29: #{kpi_model_forward.1} parent=0 // pred_fallthru
    _
  // Predicated region
  $region30: #{kpi_model_forward.1} parent=0 // pred_check
    _
  $region31: #{kpi_model_forward.1} parent=0 // pred_check_branch
    %29 = sbr.rel (0) target = $region33
  $region32: #{kpi_model_forward.1} parent=0 // pred_region
    _
  $region33: #{kpi_model_forward.1} parent=0 // pred_fallthru
    _
  // Predicated region
  $region34: #{kpi_model_forward.1} parent=0 // pred_check
    _
  $region35: #{kpi_model_forward.1} parent=0 // pred_check_branch
    %31 = sbr.rel (0) target = $region37
  $region36: #{kpi_model_forward.1} parent=0 // pred_region
    _
  $region37: #{kpi_model_forward.1} parent=0 // pred_fallthru
    _
  %v32 = vld [vmem:[%s0] sm:$0xff]
  %v33 = vld [vmem:[%s1] sm:$0xf]
  %35 = vset.pattern.permute.xlu0 0
  %36 = vperm.xlu0 %35, %v32
  %v37 = vpop.permute.xlu0 %36
  %v39 = vlaneseq
  %v40 = vshrl.u32 %v39, 7
  %v41 = vsub.s32 0, %v40
  %v42 = vrot.slane %v33, %v41
  %v43 = vmul.f32 %v37, %v42
  %v44 = vld [vmem:[%s2] sm:$0x1]
  %v46 = vlaneseq
  %v47 = vshrl.u32 %v46, 7
  %v48 = vsub.s32 0, %v47
  %v49 = vrot.slane %v44, %v48
  %v51 = vadd.f32 %v43, %v49
  %52 = vset.pattern.permute.xlu0 1
  %53 = vperm.xlu0 %52, %v32
  %v54 = vpop.permute.xlu0 %53
  %v56 = vlaneseq
  %v57 = vshrl.u32 %v56, 7
  %v58 = vsub.s32 1, %v57
  %v59 = vrot.slane %v33, %v58
  %v60 = vmul.f32 %v54, %v59
  %v61 = vadd.f32 %v51, %v60
  %62 = vset.pattern.permute.xlu0 2
  %63 = vperm.xlu0 %62, %v32
  %v64 = vpop.permute.xlu0 %63
  %v66 = vlaneseq
  %v67 = vshrl.u32 %v66, 7
  %v68 = vsub.s32 2, %v67
  %v69 = vrot.slane %v33, %v68
  %v70 = vmul.f32 %v64, %v69
  %v71 = vadd.f32 %v61, %v70
  %72 = vset.pattern.permute.xlu0 3
  %73 = vperm.xlu0 %72, %v32
  %v74 = vpop.permute.xlu0 %73
  %v76 = vlaneseq
  %v77 = vshrl.u32 %v76, 7
  %v78 = vsub.s32 3, %v77
  %v79 = vrot.slane %v33, %v78
  %v80 = vmul.f32 %v74, %v79
  %v81 = vadd.f32 %v71, %v80
  %v82 = vmax.f32 %v81, 0.0
  %v83 = vld [vmem:[%s3] sm:$0xff]
  %v84 = vld [vmem:[%s3 + $0x8] sm:$0xff]
  %v85 = vld [vmem:[%s3 + $0x10] sm:$0xff]
  %v86 = vld [vmem:[%s3 + $0x18] sm:$0xff]
  %v87 = vld [vmem:[%s3 + $0x20] sm:$0xff]
  %v88 = vld [vmem:[%s3 + $0x28] sm:$0xff]
  %v89 = vld [vmem:[%s3 + $0x30] sm:$0xff]
  %v90 = vld [vmem:[%s3 + $0x38] sm:$0xff]
  %v91 = vld [vmem:[%s3 + $0x40] sm:$0xff]
  %v92 = vld [vmem:[%s3 + $0x48] sm:$0xff]
  %v93 = vld [vmem:[%s3 + $0x50] sm:$0xff]
  %v94 = vld [vmem:[%s3 + $0x58] sm:$0xff]
  %v95 = vld [vmem:[%s3 + $0x60] sm:$0xff]
  %v96 = vld [vmem:[%s3 + $0x68] sm:$0xff]
  %v97 = vld [vmem:[%s3 + $0x70] sm:$0xff]
  %v98 = vld [vmem:[%s3 + $0x78] sm:$0xff]
  %v99 = vld [vmem:[%s4] sm:$0x1]
  %v101 = vlaneseq
  %v102 = vshrl.u32 %v101, 7
  %v103 = vsub.s32 0, %v102
  %v104 = vrot.slane %v99, %v103
  %106 = vmatprep.subr.mxu0 0.0
  %107 = vmatpush1.msra.mxu0 %v83
  %108 = vmatprep.subr.mxu0 0.0
  %109 = vmatpush1.msra.mxu0 %v84
  %110 = vmatprep.subr.mxu0 0.0
  %111 = vmatpush1.msra.mxu0 %v85
  %112 = vmatprep.subr.mxu0 0.0
  %113 = vmatpush1.msra.mxu0 %v86
  %114 = vmatprep.subr.mxu0 0.0
  %115 = vmatpush1.msra.mxu0 %v87
  %116 = vmatprep.subr.mxu0 0.0
  %117 = vmatpush1.msra.mxu0 %v88
  %118 = vmatprep.subr.mxu0 0.0
  %119 = vmatpush1.msra.mxu0 %v89
  %120 = vmatprep.subr.mxu0 0.0
  %121 = vmatpush1.msra.mxu0 %v90
  %122 = vmatprep.subr.mxu0 0.0
  %123 = vmatpush1.msra.mxu0 %v91
  %124 = vmatprep.subr.mxu0 0.0
  %125 = vmatpush1.msra.mxu0 %v92
  %126 = vmatprep.subr.mxu0 0.0
  %127 = vmatpush1.msra.mxu0 %v93
  %128 = vmatprep.subr.mxu0 0.0
  %129 = vmatpush1.msra.mxu0 %v94
  %130 = vmatprep.subr.mxu0 0.0
  %131 = vmatpush1.msra.mxu0 %v95
  %132 = vmatprep.subr.mxu0 0.0
  %133 = vmatpush1.msra.mxu0 %v96
  %134 = vmatprep.subr.mxu0 0.0
  %135 = vmatpush1.msra.mxu0 %v97
  %136 = vmatprep.subr.mxu0 0.0
  %137 = vmatpush1.msra.mxu0 %v98
  %138 = vmatprep.subr.mxu0 0.0
  %139 = vmatpush1.msra.mxu0 0.0
  %140 = vmatprep.subr.mxu0 0.0
  %141 = vmatpush1.msra.mxu0 0.0
  %142 = vmatprep.subr.mxu0 0.0
  %143 = vmatpush1.msra.mxu0 0.0
  %144 = vmatprep.subr.mxu0 0.0
  %145 = vmatpush1.msra.mxu0 0.0
  %146 = vmatprep.subr.mxu0 0.0
  %147 = vmatpush1.msra.mxu0 0.0
  %148 = vmatprep.subr.mxu0 0.0
  %149 = vmatpush1.msra.mxu0 0.0
  %150 = vmatprep.subr.mxu0 0.0
  %151 = vmatpush1.msra.mxu0 0.0
  %152 = vmatprep.subr.mxu0 0.0
  %153 = vmatpush1.msra.mxu0 0.0
  %154 = vmatprep.subr.mxu0 0.0
  %155 = vmatpush1.msra.mxu0 0.0
  %156 = vmatprep.subr.mxu0 0.0
  %157 = vmatpush1.msra.mxu0 0.0
  %158 = vmatprep.subr.mxu0 0.0
  %159 = vmatpush1.msra.mxu0 0.0
  %160 = vmatprep.subr.mxu0 0.0
  %161 = vmatpush1.msra.mxu0 0.0
  %162 = vmatprep.subr.mxu0 0.0
  %163 = vmatpush1.msra.mxu0 0.0
  %164 = vmatprep.subr.mxu0 0.0
  %165 = vmatpush1.msra.mxu0 0.0
  %166 = vmatprep.subr.mxu0 0.0
  %167 = vmatpush1.msra.mxu0 0.0
  %168 = vmatprep.subr.mxu0 0.0
  %169 = vmatpush1.msra.mxu0 0.0
  %170 = vmatprep.mubr.f32.mxu0 0.0
  %171 = vmatmul.mubr.f32.gmra.mrb[0].mxu0 %v82
  %v172 = vpop.f32.mrb[0].mxu0
  %v173 = vadd.f32 %v104, %v172
  %v174 = vpop.f32.mrb[0].mxu0
  %175 = vdwg.mxu0
  %v176 = vmax.f32 %v173, 0.0
  %v177 = vld [vmem:[%s5] sm:$0xff]
  %v178 = vld [vmem:[%s5 + $0x8] sm:$0xff]
  %v179 = vld [vmem:[%s5 + $0x10] sm:$0xff]
  %v180 = vld [vmem:[%s5 + $0x18] sm:$0xff]
  %v181 = vld [vmem:[%s5 + $0x20] sm:$0xff]
  %v182 = vld [vmem:[%s5 + $0x28] sm:$0xff]
  %v183 = vld [vmem:[%s5 + $0x30] sm:$0xff]
  %v184 = vld [vmem:[%s5 + $0x38] sm:$0xff]
  %v185 = vld [vmem:[%s6] sm:$0x1]
  %v187 = vlaneseq
  %v188 = vshrl.u32 %v187, 7
  %v189 = vsub.s32 0, %v188
  %v190 = vrot.slane %v185, %v189
  %vm192 = vcmask 523264
  %v194 = vsel %vm192, %v176, 0
  %196 = vmatprep.subr.mxu0 0.0
  %197 = vmatpush1.msra.mxu0 %v177
  %198 = vmatprep.subr.mxu0 0.0
  %199 = vmatpush1.msra.mxu0 %v178
  %200 = vmatprep.subr.mxu0 0.0
  %201 = vmatpush1.msra.mxu0 %v179
  %202 = vmatprep.subr.mxu0 0.0
  %203 = vmatpush1.msra.mxu0 %v180
  %204 = vmatprep.subr.mxu0 0.0
  %205 = vmatpush1.msra.mxu0 %v181
  %206 = vmatprep.subr.mxu0 0.0
  %207 = vmatpush1.msra.mxu0 %v182
  %208 = vmatprep.subr.mxu0 0.0
  %209 = vmatpush1.msra.mxu0 %v183
  %210 = vmatprep.subr.mxu0 0.0
  %211 = vmatpush1.msra.mxu0 %v184
  %212 = vmatprep.subr.mxu0 0.0
  %213 = vmatpush1.msra.mxu0 0.0
  %214 = vmatprep.subr.mxu0 0.0
  %215 = vmatpush1.msra.mxu0 0.0
  %216 = vmatprep.subr.mxu0 0.0
  %217 = vmatpush1.msra.mxu0 0.0
  %218 = vmatprep.subr.mxu0 0.0
  %219 = vmatpush1.msra.mxu0 0.0
  %220 = vmatprep.subr.mxu0 0.0
  %221 = vmatpush1.msra.mxu0 0.0
  %222 = vmatprep.subr.mxu0 0.0
  %223 = vmatpush1.msra.mxu0 0.0
  %224 = vmatprep.subr.mxu0 0.0
  %225 = vmatpush1.msra.mxu0 0.0
  %226 = vmatprep.subr.mxu0 0.0
  %227 = vmatpush1.msra.mxu0 0.0
  %228 = vmatprep.subr.mxu0 0.0
  %229 = vmatpush1.msra.mxu0 0.0
  %230 = vmatprep.subr.mxu0 0.0
  %231 = vmatpush1.msra.mxu0 0.0
  %232 = vmatprep.subr.mxu0 0.0
  %233 = vmatpush1.msra.mxu0 0.0
  %234 = vmatprep.subr.mxu0 0.0
  %235 = vmatpush1.msra.mxu0 0.0
  %236 = vmatprep.subr.mxu0 0.0
  %237 = vmatpush1.msra.mxu0 0.0
  %238 = vmatprep.subr.mxu0 0.0
  %239 = vmatpush1.msra.mxu0 0.0
  %240 = vmatprep.subr.mxu0 0.0
  %241 = vmatpush1.msra.mxu0 0.0
  %242 = vmatprep.subr.mxu0 0.0
  %243 = vmatpush1.msra.mxu0 0.0
  %244 = vmatprep.subr.mxu0 0.0
  %245 = vmatpush1.msra.mxu0 0.0
  %246 = vmatprep.subr.mxu0 0.0
  %247 = vmatpush1.msra.mxu0 0.0
  %248 = vmatprep.subr.mxu0 0.0
  %249 = vmatpush1.msra.mxu0 0.0
  %250 = vmatprep.subr.mxu0 0.0
  %251 = vmatpush1.msra.mxu0 0.0
  %252 = vmatprep.subr.mxu0 0.0
  %253 = vmatpush1.msra.mxu0 0.0
  %254 = vmatprep.subr.mxu0 0.0
  %255 = vmatpush1.msra.mxu0 0.0
  %256 = vmatprep.subr.mxu0 0.0
  %257 = vmatpush1.msra.mxu0 0.0
  %258 = vmatprep.subr.mxu0 0.0
  %259 = vmatpush1.msra.mxu0 0.0
  %260 = vmatprep.mubr.f32.mxu0 0.0
  %261 = vmatmul.mubr.f32.gmra.mrb[0].mxu0 %v194
  %v262 = vpop.f32.mrb[0].mxu0
  %v263 = vadd.f32 %v190, %v262
  %v264 = vpop.f32.mrb[0].mxu0
  %265 = vdwg.mxu0
  %v266 = vmax.f32 %v263, 0.0
  %v267 = vld [vmem:[%s7] sm:$0xff]
  %v268 = vld [vmem:[%s7 + $0x8] sm:$0xff]
  %v269 = vld [vmem:[%s7 + $0x10] sm:$0xff]
  %v270 = vld [vmem:[%s7 + $0x18] sm:$0xff]
  %v271 = vld [vmem:[%s8] sm:$0x1]
  %v273 = vlaneseq
  %v274 = vshrl.u32 %v273, 7
  %v275 = vsub.s32 0, %v274
  %v276 = vrot.slane %v271, %v275
  %vm278 = vcmask 261120
  %v280 = vsel %vm278, %v266, 0
  %282 = vmatprep.subr.mxu0 0.0
  %283 = vmatpush1.msra.mxu0 %v267
  %284 = vmatprep.subr.mxu0 0.0
  %285 = vmatpush1.msra.mxu0 %v268
  %286 = vmatprep.subr.mxu0 0.0
  %287 = vmatpush1.msra.mxu0 %v269
  %288 = vmatprep.subr.mxu0 0.0
  %289 = vmatpush1.msra.mxu0 %v270
  %290 = vmatprep.subr.mxu0 0.0
  %291 = vmatpush1.msra.mxu0 0.0
  %292 = vmatprep.subr.mxu0 0.0
  %293 = vmatpush1.msra.mxu0 0.0
  %294 = vmatprep.subr.mxu0 0.0
  %295 = vmatpush1.msra.mxu0 0.0
  %296 = vmatprep.subr.mxu0 0.0
  %297 = vmatpush1.msra.mxu0 0.0
  %298 = vmatprep.subr.mxu0 0.0
  %299 = vmatpush1.msra.mxu0 0.0
  %300 = vmatprep.subr.mxu0 0.0
  %301 = vmatpush1.msra.mxu0 0.0
  %302 = vmatprep.subr.mxu0 0.0
  %303 = vmatpush1.msra.mxu0 0.0
  %304 = vmatprep.subr.mxu0 0.0
  %305 = vmatpush1.msra.mxu0 0.0
  %306 = vmatprep.subr.mxu0 0.0
  %307 = vmatpush1.msra.mxu0 0.0
  %308 = vmatprep.subr.mxu0 0.0
  %309 = vmatpush1.msra.mxu0 0.0
  %310 = vmatprep.subr.mxu0 0.0
  %311 = vmatpush1.msra.mxu0 0.0
  %312 = vmatprep.subr.mxu0 0.0
  %313 = vmatpush1.msra.mxu0 0.0
  %314 = vmatprep.subr.mxu0 0.0
  %315 = vmatpush1.msra.mxu0 0.0
  %316 = vmatprep.subr.mxu0 0.0
  %317 = vmatpush1.msra.mxu0 0.0
  %318 = vmatprep.subr.mxu0 0.0
  %319 = vmatpush1.msra.mxu0 0.0
  %320 = vmatprep.subr.mxu0 0.0
  %321 = vmatpush1.msra.mxu0 0.0
  %322 = vmatprep.subr.mxu0 0.0
  %323 = vmatpush1.msra.mxu0 0.0
  %324 = vmatprep.subr.mxu0 0.0
  %325 = vmatpush1.msra.mxu0 0.0
  %326 = vmatprep.subr.mxu0 0.0
  %327 = vmatpush1.msra.mxu0 0.0
  %328 = vmatprep.subr.mxu0 0.0
  %329 = vmatpush1.msra.mxu0 0.0
  %330 = vmatprep.subr.mxu0 0.0
  %331 = vmatpush1.msra.mxu0 0.0
  %332 = vmatprep.subr.mxu0 0.0
  %333 = vmatpush1.msra.mxu0 0.0
  %334 = vmatprep.subr.mxu0 0.0
  %335 = vmatpush1.msra.mxu0 0.0
  %336 = vmatprep.subr.mxu0 0.0
  %337 = vmatpush1.msra.mxu0 0.0
  %338 = vmatprep.subr.mxu0 0.0
  %339 = vmatpush1.msra.mxu0 0.0
  %340 = vmatprep.subr.mxu0 0.0
  %341 = vmatpush1.msra.mxu0 0.0
  %342 = vmatprep.subr.mxu0 0.0
  %343 = vmatpush1.msra.mxu0 0.0
  %344 = vmatprep.subr.mxu0 0.0
  %345 = vmatpush1.msra.mxu0 0.0
  %346 = vmatprep.mubr.f32.mxu0 0.0
  %347 = vmatmul.mubr.f32.gmra.mrb[0].mxu0 %v280
  %v348 = vpop.f32.mrb[0].mxu0
  %v349 = vadd.f32 %v276, %v348
  %v350 = vpop.f32.mrb[0].mxu0
  %351 = vdwg.mxu0
  %vm352 = vcmask 64512
  %353 = vst.msk [vmem:[%s9] sm:$0xff] %vm352, %v349
  // Predicated region
  $region38: #{kpi_model_forward.1} parent=0 // pred_check
    _
  $region39: #{kpi_model_forward.1} parent=0 // pred_check_branch
    %355 = sbr.rel (0) target = $region41
  $region40: #{kpi_model_forward.1} parent=0 // pred_region
    _
  $region41: #{kpi_model_forward.1} parent=0 // pred_fallthru
    _
  // Predicated region
  $region42: #{kpi_model_forward.1} parent=0 // pred_check
    _
  $region43: #{kpi_model_forward.1} parent=0 // pred_check_branch
    %357 = sbr.rel (0) target = $region45
  $region44: #{kpi_model_forward.1} parent=0 // pred_region
    _
  $region45: #{kpi_model_forward.1} parent=0 // pred_fallthru
    _

</llo_original>
